<compile_context>
chip_gen: v7x
topology: tpu7x:2x2x1
jax: 0.10.0
libtpu: 0.0.40
codegen_flags: <defaults>
</compile_context>

<pallas_src>
import jax
import jax.numpy as jnp
from jax.experimental import pallas as pl
from jax.experimental.pallas import tpu as pltpu


def _m1_kernel(seed_ref, u_ref):
    """seed_ref: SMEM (1,) int32  ->  u_ref: SMEM (1,) float32 uniform in [0,1).

    Pure scalar-ALU splitmix32 finalizer; the 2 scalar slots per bundle absorb
    this for free (no vector unit, no VMEM traffic).
    """
    x = seed_ref[0].astype(jnp.uint32)
    x = x + jnp.uint32(0x9E3779B9)          # golden-ratio stream offset
    x = x ^ (x >> jnp.uint32(16))
    x = x * jnp.uint32(0x7FEB352D)
    x = x ^ (x >> jnp.uint32(15))
    x = x * jnp.uint32(0x846CA68B)
    x = x ^ (x >> jnp.uint32(16))
    # Top 24 bits -> exact int32 -> float32, scaled into [0, 1).
    u24 = (x >> jnp.uint32(8)).astype(jnp.int32)
    u_ref[0] = u24.astype(jnp.float32) * jnp.float32(1.0 / (1 << 24))


def m1_forward(x1, seed):
    """Mirrors m1.forward: x1's (dropout) branch is dead code and is elided.

    Returns x4: shape (1,) float32, uniform in [0, 1).
    """
    del x1  # x2 = dropout(x1 ** p1) is computed-then-discarded in PyTorch -> elided.
    seed_arr = jnp.asarray([seed], dtype=jnp.int32)

    u = pl.pallas_call(
        _m1_kernel,
        out_shape=jax.ShapeDtypeStruct((1,), jnp.float32),
        in_specs=[pl.BlockSpec(memory_space=pltpu.MemorySpace.SMEM)],   # seed scalar
        out_specs=pl.BlockSpec(memory_space=pltpu.MemorySpace.SMEM),    # (1,) scalar result
    )(seed_arr)

    return u


if __name__ == "__main__":
    key = jax.random.PRNGKey(0)
    x1 = jax.random.normal(key, (1, 2, 2), dtype=jnp.float32)  # matches torch.randn(1, 2, 2)
    out = m1_forward(x1, seed=0)
    out = jax.block_until_ready(out)
    assert out.shape == (1,) and out.dtype == jnp.float32
    assert bool(jnp.all((out >= 0.0) & (out < 1.0)))
    # Different seeds must give different draws (sanity of the hash path).
    out2 = jax.block_until_ready(m1_forward(x1, seed=1))
    assert float(out[0]) != float(out2[0])
    print("KERNEL_OK")
</pallas_src>

<mosaic_0001>
module attributes {stable_mosaic.version = 11 : i64} {
  func.func @_m1_kernel(%arg0: memref<1xi32, #tpu.memory_space<smem>>, %arg1: memref<1xf32, #tpu.memory_space<smem>>) attributes {dimension_semantics = [], scalar_prefetch = 0 : i64, scratch_operands = 0 : i64, tpu.core_type = #tpu.core_type<tc>} {
    %c0 = arith.constant 0 : index
    %0 = memref.load %arg0[%c0] : memref<1xi32, #tpu.memory_space<smem>>
    %c-1640531527_i32 = arith.constant -1640531527 : i32
    %1 = arith.addi %0, %c-1640531527_i32 : i32
    %c16_i32 = arith.constant 16 : i32
    %2 = arith.shrui %1, %c16_i32 : i32
    %3 = arith.xori %1, %2 : i32
    %c2146121005_i32 = arith.constant 2146121005 : i32
    %4 = arith.muli %3, %c2146121005_i32 : i32
    %c15_i32 = arith.constant 15 : i32
    %5 = arith.shrui %4, %c15_i32 : i32
    %6 = arith.xori %4, %5 : i32
    %c-2073254261_i32 = arith.constant -2073254261 : i32
    %7 = arith.muli %6, %c-2073254261_i32 : i32
    %c16_i32_0 = arith.constant 16 : i32
    %8 = arith.shrui %7, %c16_i32_0 : i32
    %9 = arith.xori %7, %8 : i32
    %c8_i32 = arith.constant 8 : i32
    %10 = arith.shrui %9, %c8_i32 : i32
    %11 = arith.sitofp %10 : i32 to f32
    %cst = arith.constant 5.96046448E-8 : f32
    %12 = arith.mulf %11, %cst : f32
    %c0_1 = arith.constant 0 : index
    %13 = memref.load %arg1[%c0_1] : memref<1xf32, #tpu.memory_space<smem>>
    memref.store %12, %arg1[%c0_1] : memref<1xf32, #tpu.memory_space<smem>>
    return
  }
}

</mosaic_0001>

<llo_original>
// kernel: tpu_custom_call.1
$region0: #{tpu_custom_call.1}
  #allocation0 [shape = 'u32[]', space=smem, size = 0x4, offset = 0x4, fixed_abs, tag = 'smem constant byte address 0x4 - core index']
  #allocation1 [shape = 'u32[144,128]{1,0:T(1,128)}', space=vmem, size = 0x12000, scoped, tag = 'internal scratch']
  #allocation2 [shape = 's32[1]{0:T(128)S(6)}', space=smem, size = 0x200, scoped, tag = 'scoped memory for tpu_custom_call.1']
  %s0 = inlined_call_operand.<no memory space> [shape: s32[1], index: 0, kind: input, shape index: {}]
  %s1 = inlined_call_operand.hbm [shape: f32[1], index: 1, kind: output, shape index: {}]
  %s2 = sld [smem:[#allocation0]]
  $region14: #{tpu_custom_call.1} parent=0
    _
  %s4 = ssub.s32 1, %s2
  %s5 = scalar_select 0, %s4, %s2
  %6 = sst [smem:[#allocation2]] %s0
  $region1: #{tpu_custom_call.1} parent=0
    #allocation3 [shape = 'u8[512]{0}', space=smem, size = 0x200, scoped, tag = 'output window, operand 0, single buffered']
    #allocation4 [shape = 's32[1]{0}', space=sflag, size = 0x4, scoped, tag = 'scoped memory for tpu_custom_call.1']
    %7 = vsyncpa [#allocation4], 0
    // Predicated region
    $region2: #{tpu_custom_call.1} parent=1 // pred_check
      _
    $region3: #{tpu_custom_call.1} parent=1 // pred_check_branch
      %9 = sbr.rel (0) target = $region5
    $region4: #{tpu_custom_call.1} parent=1 // pred_region
      _
    $region5: #{tpu_custom_call.1} parent=1 // pred_fallthru
      _
    %s10 = sld [smem:[#allocation2]]
    %s11 = sadd.s32 %s10, 2654435769
    %s12 = sshrl.u32 %s11, 16
    %s13 = sxor.u32 %s11, %s12
    %s14 = smul.u32 %s13, 2146121005
    %s15 = sshrl.u32 %s14, 15
    %s16 = sxor.u32 %s14, %s15
    %s17 = smul.u32 %s16, 2221713035
    %s18 = sshrl.u32 %s17, 16
    %s19 = sxor.u32 %s17, %s18
    %s20 = sshrl.u32 %s19, 8
    %s21 = scvt.s32.f32 %s20
    %s22 = smul.f32 %s21, 5.9604645e-08
    %s23 = scalar_lea.smem [#allocation3], 0
    %24 = sst [smem:[%s23]] %s22
    // Predicated region
    $region6: #{tpu_custom_call.1} parent=1 // pred_check
      _
    $region7: #{tpu_custom_call.1} parent=1 // pred_check_branch
      %26 = sbr.rel (0) target = $region9
    $region8: #{tpu_custom_call.1} parent=1 // pred_region
      %s28 = ssub.s32 16, 16
      %29 = vsyncadd [#allocation4], %s28
      %32 = dma.smem_to_hbm [#allocation3], 16, %s1, [#allocation4]
    $region9: #{tpu_custom_call.1} parent=1 // pred_fallthru
      _
    // Predicated region
    $region10: #{tpu_custom_call.1} parent=1 // pred_check
      _
    $region11: #{tpu_custom_call.1} parent=1 // pred_check_branch
      %34 = sbr.rel (0) target = $region13
    $region12: #{tpu_custom_call.1} parent=1 // pred_region
      %35 = dma.done [#allocation4], 16
    $region13: #{tpu_custom_call.1} parent=1 // pred_fallthru
      _
    %36 = sfence
    %37 = vsyncpa [#allocation4], 1

</llo_original>
